<compile_context>
chip_gen: v7x
topology: tpu7x:2x2x1
jax: 0.10.0
libtpu: 0.0.40
codegen_flags: <defaults>
</compile_context>

<pallas_src>
import functools

import jax
import jax.numpy as jnp
from jax import lax
from jax.experimental import pallas as pl
from jax.experimental.pallas import tpu as pltpu

START_TIME = 0.0
END_TIME = 1.0
_INV_TIME_SPAN = 1.0 / (END_TIME - START_TIME)
_LANE = 128


def _round_up(x, m):
    return ((x + m - 1) // m) * m


# ------------------------------------------------------------------ weight prep
def prepare_node_weights(w_hr, w_hz, w_hn, weight_dtype=jnp.bfloat16):
    """One-time weight prep; call OUTSIDE the ODE-solver hot loop.

    Layout: w_rz_t has shape (H, 2*H_lane), H_lane = round_up(H, 128), with
      W_hr^T at columns [0, H)  and  W_hz^T at columns [H_lane, H_lane + H).
    Lane-aligned halves let the kernel either run one fused (H, 2H) MXU pass
    (H % 128 == 0, slice on a vreg boundary) or two aligned (H, H) passes.

    weight_dtype=bfloat16 (default) halves resident VMEM and per-call HBM
    weight traffic on v5e/v6e/v7x; use float32 for bit-tight parity with the
    f32 PyTorch reference. Elementwise math in the kernel is always f32.
    """
    H = w_hr.shape[0]
    h_lane = _round_up(H, _LANE)
    w_rz_t = jnp.zeros((H, 2 * h_lane), dtype=weight_dtype)
    w_rz_t = w_rz_t.at[:, :H].set(w_hr.T.astype(weight_dtype))
    w_rz_t = w_rz_t.at[:, h_lane:h_lane + H].set(w_hz.T.astype(weight_dtype))
    w_n_t = w_hn.T.astype(weight_dtype)
    return w_rz_t, w_n_t


# ------------------------------------------------------------------ kernel bodies
def _gru_ode_dh(h, wrz_ref, wn_ref):
    """dh = (1 - z) * (g - h) for GRUODECell (bias=False, x = zeros). f32 in/out."""
    H = h.shape[1]
    h_lane = wrz_ref.shape[1] // 2
    hw = h.astype(wrz_ref.dtype)
    if H == h_lane:
        # Fused r/z gate: one (H, 2H) MXU pass; the slice at column H is a
        # 128-lane vreg boundary, so no intra-vreg shuffles.
        rz = jnp.dot(hw, wrz_ref[...], preferred_element_type=jnp.float32)
        r = jax.nn.sigmoid(rz[:, :H])
        z = jax.nn.sigmoid(rz[:, H:])
    else:
        # H not a multiple of 128: two lane-aligned (H, H) passes instead of a
        # fused pass whose slice would cut inside a vreg.
        r = jax.nn.sigmoid(
            jnp.dot(hw, wrz_ref[:, :H], preferred_element_type=jnp.float32))
        z = jax.nn.sigmoid(
            jnp.dot(hw, wrz_ref[:, h_lane:h_lane + H],
                    preferred_element_type=jnp.float32))
    g = jnp.tanh(jnp.dot((r * h).astype(wn_ref.dtype), wn_ref[...],
                         preferred_element_type=jnp.float32))
    return (1.0 - z) * (g - h)


def _node_forward_kernel(t0_ref, t1_ref, h_ref, wrz_ref, wn_ref, dx_ref):
    h = h_ref[...].astype(jnp.float32)                              # (tb, H)
    # ratio computed in-kernel (free VPU slots; no standalone wrapper HLO).
    ratio = (t1_ref[...] - t0_ref[...]).astype(jnp.float32) * _INV_TIME_SPAN
    # t = (s - start)*ratio + t0 is never consumed by GRUODECell -> elided.
    dh = _gru_ode_dh(h, wrz_ref, wn_ref)
    dx_ref[...] = (dh * ratio).astype(dx_ref.dtype)                 # fused epilogue store


def _node_rk4_kernel(t0_ref, t1_ref, h0_ref, wrz_ref, wn_ref, h_out_ref,
                     *, num_steps, step_size):
    """Full fixed-step RK4 solve start_time -> end_time with resident weights."""
    h = h0_ref[...].astype(jnp.float32)                             # (tb, H)
    ratio = (t1_ref[...] - t0_ref[...]).astype(jnp.float32) * _INV_TIME_SPAN
    # Hoist the (tb,1)->(tb,H) broadcast out of the loop (JAX does not CSE it).
    ratio_b = jnp.broadcast_to(ratio, h.shape)
    dt = jnp.float32(step_size)

    def f(hh):
        return _gru_ode_dh(hh, wrz_ref, wn_ref) * ratio_b

    def step(_, hh):
        k1 = f(hh)
        k2 = f(hh + 0.5 * dt * k1)
        k3 = f(hh + 0.5 * dt * k2)
        k4 = f(hh + dt * k3)
        return hh + (dt / 6.0) * (k1 + 2.0 * k2 + 2.0 * k3 + k4)

    h = lax.fori_loop(0, num_steps, step, h, unroll=True)
    h_out_ref[...] = h.astype(h_out_ref.dtype)


# ------------------------------------------------------------------ wrappers
def _pick_batch_tile(B, H, block_b):
    """Batch tile (multiple of 8): >= 2 grid blocks when B > 8 so the 'parallel'
    batch axis can shard across v7x's two TensorCores; capped so double-buffered
    activation blocks stay within a modest VMEM budget."""
    if B <= 8:
        return B
    tb = min(block_b, _round_up(pl.cdiv(B, 2), 8))
    act_budget = 16 << 20                              # activations only (f32)
    per_row = (2 * H + 2) * 4                          # h + dx + t0 + t1
    max_tb = max(8, ((act_budget // (2 * per_row)) // 8) * 8)
    return max(8, min(tb, max_tb))


def _vmem_limit_bytes(weight_bytes, act_bytes):
    try:
        cap = int(pltpu.get_tpu_info().vmem_capacity_bytes)
    except Exception:
        cap = 64 << 20                                 # conservative: v7x per-TC VMEM
    want = 2 * (weight_bytes + act_bytes) + (8 << 20)  # 2x for double buffering + headroom
    return int(min(max(want, 32 << 20), cap))


def _common_specs(tb, H, h_lane):
    in_specs = [
        pl.BlockSpec((tb, 1), lambda i: (i, 0)),              # t0
        pl.BlockSpec((tb, 1), lambda i: (i, 0)),              # t1
        pl.BlockSpec((tb, H), lambda i: (i, 0)),              # h
        pl.BlockSpec((H, 2 * h_lane), lambda i: (0, 0)),      # [W_hr^T | W_hz^T], VMEM-resident
        pl.BlockSpec((H, H), lambda i: (0, 0)),               # W_hn^T, VMEM-resident
    ]
    out_spec = pl.BlockSpec((tb, H), lambda i: (i, 0))
    return in_specs, out_spec


@functools.partial(jax.jit, static_argnames=("block_b",))
def node_forward(s, t0, t1, x, w_rz_t, w_n_t, *, block_b=512):
    """Pallas implementation of NODE.forward (one ODE-function evaluation).

    Args:
      s:             scalar time point (never consumed by GRUODECell -> unused).
      t0, t1:        (B, 1) f32.
      x:             (B, H) f32 hidden state h.
      w_rz_t, w_n_t: output of prepare_node_weights().
    Returns:
      (zeros_like(t0), zeros_like(t1), dx) with dx of shape (B, H).
    Note: in a real solver loop, prefer node_integrate_rk4 (weights fetched once
    per solve) and allocate the zero dt0/dt1 outputs once outside the loop.
    """
    del s
    B, H = x.shape
    h_lane = w_rz_t.shape[1] // 2
    tb = _pick_batch_tile(B, H, block_b)
    grid = (pl.cdiv(B, tb),)

    w_bytes = (w_rz_t.size * w_rz_t.dtype.itemsize
               + w_n_t.size * w_n_t.dtype.itemsize)
    act_bytes = tb * (2 * H + 2) * 4
    vmem_limit = _vmem_limit_bytes(w_bytes, act_bytes)
    # TODO(synk): when 12*H^2*itemsize exceeds ~half the VMEM budget (H >= ~1500
    # f32 on v7x's 64 MiB), add a second 'arbitrary' grid axis tiling the weight
    # N-dimension in 512-1024-lane slabs instead of keeping full weights resident.

    in_specs, out_spec = _common_specs(tb, H, h_lane)
    dx = pl.pallas_call(
        _node_forward_kernel,
        out_shape=jax.ShapeDtypeStruct((B, H), x.dtype),
        grid_spec=pltpu.PrefetchScalarGridSpec(
            num_scalar_prefetch=0, grid=grid,
            in_specs=in_specs, out_specs=out_spec,
        ),
        compiler_params=pltpu.CompilerParams(
            dimension_semantics=("parallel",),
            vmem_limit_bytes=vmem_limit,
        ),
    )(t0, t1, x, w_rz_t, w_n_t)

    return jnp.zeros_like(t0), jnp.zeros_like(t1), dx


@functools.partial(jax.jit, static_argnames=("step_size", "block_b"))
def node_integrate_rk4(t0, t1, x, w_rz_t, w_n_t, *, step_size=0.25, block_b=512):
    """Full fixed-step RK4 solve of NODE's ODE from start_time to end_time,
    fused into ONE pallas_call: all RK stages / steps (16 f-evals at
    step_size=0.25) reuse weights that were DMA'd to VMEM once, instead of
    re-fetching 12*H^2*itemsize bytes from HBM per f-eval.

    Returns the final hidden state h(end_time) of shape (B, H).
    TODO(synk): torchdiffeq's 'rk4' uses the 3/8 (rk4_alt) tableau; this kernel
    uses the classical RK4 tableau — swap coefficients if exact solver parity
    with torchdiffeq is required.
    """
    B, H = x.shape
    h_lane = w_rz_t.shape[1] // 2
    num_steps = int(round((END_TIME - START_TIME) / float(step_size)))
    tb = _pick_batch_tile(B, H, block_b)
    grid = (pl.cdiv(B, tb),)

    w_bytes = (w_rz_t.size * w_rz_t.dtype.itemsize
               + w_n_t.size * w_n_t.dtype.itemsize)
    act_bytes = tb * (2 * H + 2) * 4
    vmem_limit = _vmem_limit_bytes(w_bytes, act_bytes)

    kernel = functools.partial(_node_rk4_kernel,
                               num_steps=num_steps, step_size=float(step_size))
    in_specs, out_spec = _common_specs(tb, H, h_lane)
    return pl.pallas_call(
        kernel,
        out_shape=jax.ShapeDtypeStruct((B, H), x.dtype),
        grid_spec=pltpu.PrefetchScalarGridSpec(
            num_scalar_prefetch=0, grid=grid,
            in_specs=in_specs, out_specs=out_spec,
        ),
        compiler_params=pltpu.CompilerParams(
            dimension_semantics=("parallel",),
            vmem_limit_bytes=vmem_limit,
        ),
    )(t0, t1, x, w_rz_t, w_n_t)


# ------------------------------------------------------------------ references
def node_forward_ref(s, t0, t1, x, w_hr, w_hz, w_hn):
    """Pure-JAX reference matching the PyTorch NODE.forward."""
    del s
    ratio = (t1 - t0) / (END_TIME - START_TIME)
    r = jax.nn.sigmoid(x @ w_hr.T)
    z = jax.nn.sigmoid(x @ w_hz.T)
    g = jnp.tanh((r * x) @ w_hn.T)
    dh = (1.0 - z) * (g - x)
    return jnp.zeros_like(t0), jnp.zeros_like(t1), dh * ratio


def node_integrate_rk4_ref(t0, t1, x, w_hr, w_hz, w_hn, step_size=0.25):
    """Pure-JAX classical-RK4 reference for the fused solve kernel."""
    def f(h):
        return node_forward_ref(0.0, t0, t1, h, w_hr, w_hz, w_hn)[2]
    num_steps = int(round((END_TIME - START_TIME) / step_size))
    h, dt = x, step_size
    for _ in range(num_steps):
        k1 = f(h)
        k2 = f(h + 0.5 * dt * k1)
        k3 = f(h + 0.5 * dt * k2)
        k4 = f(h + dt * k3)
        h = h + (dt / 6.0) * (k1 + 2.0 * k2 + 2.0 * k3 + k4)
    return h


# ------------------------------------------------------------------ demo / checks
if __name__ == "__main__":
    import numpy as np

    def _make_inputs(key, B, H):
        k_x, k_t1, k_r, k_z, k_n = jax.random.split(key, 5)
        x = jax.random.normal(k_x, (B, H), dtype=jnp.float32)
        t0 = jnp.zeros((B, 1), dtype=jnp.float32)            # as in integrate(): zeros
        # t1 = log10(|delta_t| + 1) + 0.01, delta_t ~ U[0, 1)
        t1 = (jnp.log10(jnp.abs(jax.random.uniform(k_t1, (B, 1))) + 1.0)
              + 0.01).astype(jnp.float32)
        bound = 1.0 / float(np.sqrt(H))                       # nn.Linear default init range
        w_hr = jax.random.uniform(k_r, (H, H), minval=-bound, maxval=bound, dtype=jnp.float32)
        w_hz = jax.random.uniform(k_z, (H, H), minval=-bound, maxval=bound, dtype=jnp.float32)
        w_hn = jax.random.uniform(k_n, (H, H), minval=-bound, maxval=bound, dtype=jnp.float32)
        return x, t0, t1, w_hr, w_hz, w_hn

    key = jax.random.PRNGKey(0)
    key_small, key_large = jax.random.split(key)
    s = 0.5  # ODE time point (unused by GRUODECell)

    # 1) forward, B=8, H=32 (non-lane-multiple path), f32 weights: tight check.
    x, t0, t1, w_hr, w_hz, w_hn = _make_inputs(key_small, 8, 32)
    w_rz_f32, w_n_f32 = prepare_node_weights(w_hr, w_hz, w_hn, weight_dtype=jnp.float32)
    out = jax.block_until_ready(node_forward(s, t0, t1, x, w_rz_f32, w_n_f32))
    ref = jax.block_until_ready(node_forward_ref(s, t0, t1, x, w_hr, w_hz, w_hn))
    np.testing.assert_allclose(np.asarray(out[2]), np.asarray(ref[2]), rtol=1e-5, atol=1e-5)
    assert np.all(np.asarray(out[0]) == 0.0) and np.all(np.asarray(out[1]) == 0.0)

    # 2) forward, bf16 weights (v5e/v6e/v7x HBM-traffic path): looser tolerance
    #    is expected precision loss vs the f32 reference, not a bug.
    w_rz_bf, w_n_bf = prepare_node_weights(w_hr, w_hz, w_hn, weight_dtype=jnp.bfloat16)
    out_bf = jax.block_until_ready(node_forward(s, t0, t1, x, w_rz_bf, w_n_bf))
    np.testing.assert_allclose(np.asarray(out_bf[2]), np.asarray(ref[2]), rtol=3e-2, atol=3e-2)

    # 3) forward, B=16, H=128: fused (H,2H) rz pass + 2-block "parallel" grid.
    x2, t02, t12, w_hr2, w_hz2, w_hn2 = _make_inputs(key_large, 16, 128)
    w_rz2, w_n2 = prepare_node_weights(w_hr2, w_hz2, w_hn2, weight_dtype=jnp.float32)
    out2 = jax.block_until_ready(node_forward(s, t02, t12, x2, w_rz2, w_n2))
    ref2 = jax.block_until_ready(node_forward_ref(s, t02, t12, x2, w_hr2, w_hz2, w_hn2))
    np.testing.assert_allclose(np.asarray(out2[2]), np.asarray(ref2[2]), rtol=1e-4, atol=1e-4)

    # 4) fused fixed-step RK4 solve (weights resident across all 16 f-evals).
    h_fused = jax.block_until_ready(
        node_integrate_rk4(t0, t1, x, w_rz_f32, w_n_f32, step_size=0.25))
    h_ref = jax.block_until_ready(
        node_integrate_rk4_ref(t0, t1, x, w_hr, w_hz, w_hn, step_size=0.25))
    np.testing.assert_allclose(np.asarray(h_fused), np.asarray(h_ref), rtol=1e-4, atol=1e-4)

    print("KERNEL_OK")
</pallas_src>

<mosaic_0001>
module attributes {stable_mosaic.version = 11 : i64} {
  func.func @_node_forward_kernel(%arg0: i32, %arg1: memref<8x1xf32, #tpu.memory_space<vmem>>, %arg2: memref<8x1xf32, #tpu.memory_space<vmem>>, %arg3: memref<8x32xf32, #tpu.memory_space<vmem>>, %arg4: memref<32x256xf32, #tpu.memory_space<vmem>>, %arg5: memref<32x32xf32, #tpu.memory_space<vmem>>, %arg6: memref<8x32xf32, #tpu.memory_space<vmem>>) attributes {dimension_semantics = [#tpu.dimension_semantics<parallel>], iteration_bounds = array<i64: 1>, scalar_prefetch = 0 : i64, scratch_operands = 0 : i64, tpu.core_type = #tpu.core_type<tc>, window_params = [{transform_indices = @transform_0, window_bounds = array<i64: 8, 1>}, {transform_indices = @transform_1, window_bounds = array<i64: 8, 1>}, {transform_indices = @transform_2, window_bounds = array<i64: 8, 32>}, {pipeline_mode = #tpu.pipeline_mode<synchronous>, transform_indices = @transform_3, window_bounds = array<i64: 32, 256>}, {pipeline_mode = #tpu.pipeline_mode<synchronous>, transform_indices = @transform_4, window_bounds = array<i64: 32, 32>}, {transform_indices = @transform_5, window_bounds = array<i64: 8, 32>}]} {
    %c0 = arith.constant 0 : index
    %c0_0 = arith.constant 0 : index
    %0 = vector.load %arg3[%c0, %c0_0] : memref<8x32xf32, #tpu.memory_space<vmem>>, vector<8x32xf32>
    %c0_1 = arith.constant 0 : index
    %c0_2 = arith.constant 0 : index
    %1 = vector.load %arg2[%c0_1, %c0_2] : memref<8x1xf32, #tpu.memory_space<vmem>>, vector<8x1xf32>
    %c0_3 = arith.constant 0 : index
    %c0_4 = arith.constant 0 : index
    %2 = vector.load %arg1[%c0_3, %c0_4] : memref<8x1xf32, #tpu.memory_space<vmem>>, vector<8x1xf32>
    %3 = arith.subf %1, %2 : vector<8x1xf32>
    %cst = arith.constant 1.000000e+00 : f32
    %4 = vector.broadcast %cst : f32 to vector<8x1xf32>
    %5 = arith.mulf %3, %4 : vector<8x1xf32>
    %c0_5 = arith.constant 0 : index
    %c0_6 = arith.constant 0 : index
    %6 = vector.load %arg4[%c0_5, %c0_6] : memref<32x256xf32, #tpu.memory_space<vmem>>, vector<32x32xf32>
    %cst_7 = arith.constant dense<0.000000e+00> : vector<8x32xf32>
    %7 = tpu.matmul %0, %6, %cst_7 {dimension_numbers = #tpu.dot_dimension_numbers<[1], [0], [0], [1], [0, 0, 1, 1], [], []>} : vector<8x32xf32>, vector<32x32xf32>, vector<8x32xf32> -> vector<8x32xf32>
    %8 = arith.negf %7 : vector<8x32xf32>
    %9 = math.exp %8 : vector<8x32xf32>
    %cst_8 = arith.constant 1.000000e+00 : f32
    %10 = vector.broadcast %cst_8 : f32 to vector<8x32xf32>
    %11 = arith.addf %10, %9 : vector<8x32xf32>
    %12 = arith.divf %10, %11 : vector<8x32xf32>
    %c0_9 = arith.constant 0 : index
    %c128 = arith.constant 128 : index
    %13 = vector.load %arg4[%c0_9, %c128] : memref<32x256xf32, #tpu.memory_space<vmem>>, vector<32x32xf32>
    %cst_10 = arith.constant dense<0.000000e+00> : vector<8x32xf32>
    %14 = tpu.matmul %0, %13, %cst_10 {dimension_numbers = #tpu.dot_dimension_numbers<[1], [0], [0], [1], [0, 0, 1, 1], [], []>} : vector<8x32xf32>, vector<32x32xf32>, vector<8x32xf32> -> vector<8x32xf32>
    %15 = arith.negf %14 : vector<8x32xf32>
    %16 = math.exp %15 : vector<8x32xf32>
    %cst_11 = arith.constant 1.000000e+00 : f32
    %17 = vector.broadcast %cst_11 : f32 to vector<8x32xf32>
    %18 = arith.addf %17, %16 : vector<8x32xf32>
    %19 = arith.divf %17, %18 : vector<8x32xf32>
    %20 = arith.mulf %12, %0 : vector<8x32xf32>
    %c0_12 = arith.constant 0 : index
    %c0_13 = arith.constant 0 : index
    %21 = vector.load %arg5[%c0_12, %c0_13] : memref<32x32xf32, #tpu.memory_space<vmem>>, vector<32x32xf32>
    %cst_14 = arith.constant dense<0.000000e+00> : vector<8x32xf32>
    %22 = tpu.matmul %20, %21, %cst_14 {dimension_numbers = #tpu.dot_dimension_numbers<[1], [0], [0], [1], [0, 0, 1, 1], [], []>} : vector<8x32xf32>, vector<32x32xf32>, vector<8x32xf32> -> vector<8x32xf32>
    %23 = math.tanh %22 : vector<8x32xf32>
    %cst_15 = arith.constant 1.000000e+00 : f32
    %24 = vector.broadcast %cst_15 : f32 to vector<8x32xf32>
    %25 = arith.subf %24, %19 : vector<8x32xf32>
    %26 = arith.subf %23, %0 : vector<8x32xf32>
    %27 = arith.mulf %25, %26 : vector<8x32xf32>
    %28 = vector.broadcast %5 : vector<8x1xf32> to vector<8x32xf32>
    %29 = arith.mulf %27, %28 : vector<8x32xf32>
    %c0_16 = arith.constant 0 : index
    %c0_17 = arith.constant 0 : index
    %30 = vector.load %arg6[%c0_16, %c0_17] : memref<8x32xf32, #tpu.memory_space<vmem>>, vector<8x32xf32>
    tpu.vector_store %arg6[%c0_16, %c0_17], %29 {strides = array<i32>} : memref<8x32xf32, #tpu.memory_space<vmem>>, vector<8x32xf32>,
    return
  }
  func.func @transform_0(%arg0: i32) -> (i32, i32) {
    %c0_i32 = arith.constant 0 : i32
    %c0_i32_0 = arith.constant 0 : i32
    return %arg0, %c0_i32 : i32, i32
  }
  func.func @transform_1(%arg0: i32) -> (i32, i32) {
    %c0_i32 = arith.constant 0 : i32
    %c0_i32_0 = arith.constant 0 : i32
    return %arg0, %c0_i32 : i32, i32
  }
  func.func @transform_2(%arg0: i32) -> (i32, i32) {
    %c0_i32 = arith.constant 0 : i32
    %c0_i32_0 = arith.constant 0 : i32
    return %arg0, %c0_i32 : i32, i32
  }
  func.func @transform_3(%arg0: i32) -> (i32, i32) {
    %c0_i32 = arith.constant 0 : i32
    %c0_i32_0 = arith.constant 0 : i32
    %c0_i32_1 = arith.constant 0 : i32
    return %c0_i32, %c0_i32_0 : i32, i32
  }
  func.func @transform_4(%arg0: i32) -> (i32, i32) {
    %c0_i32 = arith.constant 0 : i32
    %c0_i32_0 = arith.constant 0 : i32
    %c0_i32_1 = arith.constant 0 : i32
    return %c0_i32, %c0_i32_0 : i32, i32
  }
  func.func @transform_5(%arg0: i32) -> (i32, i32) {
    %c0_i32 = arith.constant 0 : i32
    %c0_i32_0 = arith.constant 0 : i32
    return %arg0, %c0_i32 : i32, i32
  }
}

</mosaic_0001>

<llo_original>
// kernel: node_forward.1
$region0: #{node_forward.1}
  #allocation0 [shape = 'u32[]', space=smem, size = 0x4, offset = 0x4, fixed_abs, tag = 'smem constant byte address 0x4 - core index']
  #allocation1 [shape = 'u32[144,128]{1,0:T(1,128)}', space=vmem, size = 0x12000, scoped, tag = 'internal scratch']
  %s0 = inlined_call_operand.vmem [shape: f32[8,1], index: 0, kind: input, shape index: {}]
  %s1 = inlined_call_operand.vmem [shape: f32[8,1], index: 1, kind: input, shape index: {}]
  %s2 = inlined_call_operand.vmem [shape: f32[8,32], index: 2, kind: input, shape index: {}]
  %s3 = inlined_call_operand.hbm [shape: f32[32,256], index: 3, kind: input, shape index: {}]
  %s4 = inlined_call_operand.hbm [shape: f32[32,32], index: 4, kind: input, shape index: {}]
  %s5 = inlined_call_operand.hbm [shape: f32[8,32], index: 5, kind: output, shape index: {}]
  %s6 = sld [smem:[#allocation0]]
  $region38: #{node_forward.1} parent=0
    _
  %s8 = ssub.s32 1, %s6
  %s9 = scalar_select 0, %s8, %s6
  $region1: #{node_forward.1} parent=0
    #allocation2 [shape = 'u8[32768]{0}', space=vmem, size = 0x8000, scoped, tag = 'input window, operand 3, single buffered']
    #allocation3 [shape = 's32[1]{0}', space=sflag, size = 0x4, scoped, tag = 'scoped memory for node_forward.1']
    #allocation4 [shape = 's32[1]{0}', space=sflag, size = 0x4, scoped, tag = 'scoped memory for node_forward.1']
    #allocation5 [shape = 'u8[16384]{0}', space=vmem, size = 0x4000, scoped, tag = 'input window, operand 4, single buffered']
    #allocation6 [shape = 's32[1]{0}', space=sflag, size = 0x4, scoped, tag = 'scoped memory for node_forward.1']
    #allocation7 [shape = 'u8[4096]{0}', space=vmem, size = 0x1000, scoped, tag = 'output window, operand 0, single buffered']
    %10 = vsyncpa [#allocation3], 0
    %11 = vsyncpa [#allocation6], 0
    %12 = vsyncpa [#allocation4], 0
    // Predicated region
    $region2: #{node_forward.1} parent=1 // pred_check
      _
    $region3: #{node_forward.1} parent=1 // pred_check_branch
      %14 = sbr.rel (0) target = $region5
    $region4: #{node_forward.1} parent=1 // pred_region
      _
    $region5: #{node_forward.1} parent=1 // pred_fallthru
      _
    // Predicated region
    $region6: #{node_forward.1} parent=1 // pred_check
      _
    $region7: #{node_forward.1} parent=1 // pred_check_branch
      %16 = sbr.rel (0) target = $region9
    $region8: #{node_forward.1} parent=1 // pred_region
      _
    $region9: #{node_forward.1} parent=1 // pred_fallthru
      _
    // Predicated region
    $region10: #{node_forward.1} parent=1 // pred_check
      _
    $region11: #{node_forward.1} parent=1 // pred_check_branch
      %18 = sbr.rel (0) target = $region13
    $region12: #{node_forward.1} parent=1 // pred_region
      _
    $region13: #{node_forward.1} parent=1 // pred_fallthru
      _
    // Predicated region
    $region14: #{node_forward.1} parent=1 // pred_check
      _
    $region15: #{node_forward.1} parent=1 // pred_check_branch
      %20 = sbr.rel (0) target = $region17
    $region16: #{node_forward.1} parent=1 // pred_region
      %s22 = ssub.s32 1024, 1024
      %23 = vsyncadd [#allocation3], %s22
      %s24 = sshll.u32 [#allocation2], 4
      %s25 = int_to_ptr.vmem [resolvable:$true] %s24
      %30 = dma.hbm_to_vmem [thread:$0]  %s3, 1024, %s25, [#allocation3], 256, 256, 16
    $region17: #{node_forward.1} parent=1 // pred_fallthru
      _
    // Predicated region
    $region18: #{node_forward.1} parent=1 // pred_check
      _
    $region19: #{node_forward.1} parent=1 // pred_check_branch
      %32 = sbr.rel (0) target = $region21
    $region20: #{node_forward.1} parent=1 // pred_region
      %s34 = ssub.s32 512, 512
      %35 = vsyncadd [#allocation6], %s34
      %s36 = sshll.u32 [#allocation5], 4
      %s37 = int_to_ptr.vmem [resolvable:$true] %s36
      %42 = dma.hbm_to_vmem [thread:$0]  %s4, 512, %s37, [#allocation6], 128, 128, 8
    $region21: #{node_forward.1} parent=1 // pred_fallthru
      _
    // Predicated region
    $region22: #{node_forward.1} parent=1 // pred_check
      _
    $region23: #{node_forward.1} parent=1 // pred_check_branch
      %44 = sbr.rel (0) target = $region25
    $region24: #{node_forward.1} parent=1 // pred_region
      %45 = dma.done [#allocation3], 1024
    $region25: #{node_forward.1} parent=1 // pred_fallthru
      _
    // Predicated region
    $region26: #{node_forward.1} parent=1 // pred_check
      _
    $region27: #{node_forward.1} parent=1 // pred_check_branch
      %47 = sbr.rel (0) target = $region29
    $region28: #{node_forward.1} parent=1 // pred_region
      %48 = dma.done [#allocation6], 512
    $region29: #{node_forward.1} parent=1 // pred_fallthru
      _
    %v49 = vld [vmem:[%s2] sm:$0xff]
    %v50 = vld [vmem:[%s1] sm:$0xff]
    %v51 = vld [vmem:[%s0] sm:$0xff]
    %v52 = vsub.f32 %v50, %v51
    %v53 = vld [vmem:[#allocation2] sm:$0xff]
    %v54 = vld [vmem:[#allocation2 + $0x10] sm:$0xff]
    %v55 = vld [vmem:[#allocation2 + $0x20] sm:$0xff]
    %v56 = vld [vmem:[#allocation2 + $0x30] sm:$0xff]
    %vm57 = vcmask 261120
    %v59 = vsel %vm57, %v49, 0
    %61 = vmatprep.subr.mxu0 0.0
    %62 = vmatpush1.msra.mxu0 %v53
    %63 = vmatprep.subr.mxu0 0.0
    %64 = vmatpush1.msra.mxu0 %v54
    %65 = vmatprep.subr.mxu0 0.0
    %66 = vmatpush1.msra.mxu0 %v55
    %67 = vmatprep.subr.mxu0 0.0
    %68 = vmatpush1.msra.mxu0 %v56
    %69 = vmatprep.subr.mxu0 0.0
    %70 = vmatpush1.msra.mxu0 0.0
    %71 = vmatprep.subr.mxu0 0.0
    %72 = vmatpush1.msra.mxu0 0.0
    %73 = vmatprep.subr.mxu0 0.0
    %74 = vmatpush1.msra.mxu0 0.0
    %75 = vmatprep.subr.mxu0 0.0
    %76 = vmatpush1.msra.mxu0 0.0
    %77 = vmatprep.subr.mxu0 0.0
    %78 = vmatpush1.msra.mxu0 0.0
    %79 = vmatprep.subr.mxu0 0.0
    %80 = vmatpush1.msra.mxu0 0.0
    %81 = vmatprep.subr.mxu0 0.0
    %82 = vmatpush1.msra.mxu0 0.0
    %83 = vmatprep.subr.mxu0 0.0
    %84 = vmatpush1.msra.mxu0 0.0
    %85 = vmatprep.subr.mxu0 0.0
    %86 = vmatpush1.msra.mxu0 0.0
    %87 = vmatprep.subr.mxu0 0.0
    %88 = vmatpush1.msra.mxu0 0.0
    %89 = vmatprep.subr.mxu0 0.0
    %90 = vmatpush1.msra.mxu0 0.0
    %91 = vmatprep.subr.mxu0 0.0
    %92 = vmatpush1.msra.mxu0 0.0
    %93 = vmatprep.subr.mxu0 0.0
    %94 = vmatpush1.msra.mxu0 0.0
    %95 = vmatprep.subr.mxu0 0.0
    %96 = vmatpush1.msra.mxu0 0.0
    %97 = vmatprep.subr.mxu0 0.0
    %98 = vmatpush1.msra.mxu0 0.0
    %99 = vmatprep.subr.mxu0 0.0
    %100 = vmatpush1.msra.mxu0 0.0
    %101 = vmatprep.subr.mxu0 0.0
    %102 = vmatpush1.msra.mxu0 0.0
    %103 = vmatprep.subr.mxu0 0.0
    %104 = vmatpush1.msra.mxu0 0.0
    %105 = vmatprep.subr.mxu0 0.0
    %106 = vmatpush1.msra.mxu0 0.0
    %107 = vmatprep.subr.mxu0 0.0
    %108 = vmatpush1.msra.mxu0 0.0
    %109 = vmatprep.subr.mxu0 0.0
    %110 = vmatpush1.msra.mxu0 0.0
    %111 = vmatprep.subr.mxu0 0.0
    %112 = vmatpush1.msra.mxu0 0.0
    %113 = vmatprep.subr.mxu0 0.0
    %114 = vmatpush1.msra.mxu0 0.0
    %115 = vmatprep.subr.mxu0 0.0
    %116 = vmatpush1.msra.mxu0 0.0
    %117 = vmatprep.subr.mxu0 0.0
    %118 = vmatpush1.msra.mxu0 0.0
    %119 = vmatprep.subr.mxu0 0.0
    %120 = vmatpush1.msra.mxu0 0.0
    %121 = vmatprep.subr.mxu0 0.0
    %122 = vmatpush1.msra.mxu0 0.0
    %123 = vmatprep.subr.mxu0 0.0
    %124 = vmatpush1.msra.mxu0 0.0
    %125 = vmatprep.mubr.f32.mxu0 0.0
    %126 = vmatmul.mubr.f32.gmra.mrb[0].mxu0 %v59
    %v127 = vpop.f32.mrb[0].mxu0
    %v128 = vadd.f32 0.0, %v127
    %v129 = vpop.f32.mrb[0].mxu0
    %130 = vdwg.mxu0
    %v131 = vxor.u32 %v128, 2147483648
    %v132 = vmul.f32 %v131, 1.442695
    %v133 = vpow.pop %v132
    %v134 = vadd.f32 %v133, 1.0
    %v135 = vrcp.pop %v134
    %v136 = vmul.f32 1.0, %v135
    %v137 = vld [vmem:[#allocation2 + $0x8] sm:$0xff]
    %v138 = vld [vmem:[#allocation2 + $0x18] sm:$0xff]
    %v139 = vld [vmem:[#allocation2 + $0x28] sm:$0xff]
    %v140 = vld [vmem:[#allocation2 + $0x38] sm:$0xff]
    %141 = vmatprep.subr.mxu0 0.0
    %142 = vmatpush1.msra.mxu0 %v137
    %143 = vmatprep.subr.mxu0 0.0
    %144 = vmatpush1.msra.mxu0 %v138
    %145 = vmatprep.subr.mxu0 0.0
    %146 = vmatpush1.msra.mxu0 %v139
    %147 = vmatprep.subr.mxu0 0.0
    %148 = vmatpush1.msra.mxu0 %v140
    %149 = vmatprep.subr.mxu0 0.0
    %150 = vmatpush1.msra.mxu0 0.0
    %151 = vmatprep.subr.mxu0 0.0
    %152 = vmatpush1.msra.mxu0 0.0
    %153 = vmatprep.subr.mxu0 0.0
    %154 = vmatpush1.msra.mxu0 0.0
    %155 = vmatprep.subr.mxu0 0.0
    %156 = vmatpush1.msra.mxu0 0.0
    %157 = vmatprep.subr.mxu0 0.0
    %158 = vmatpush1.msra.mxu0 0.0
    %159 = vmatprep.subr.mxu0 0.0
    %160 = vmatpush1.msra.mxu0 0.0
    %161 = vmatprep.subr.mxu0 0.0
    %162 = vmatpush1.msra.mxu0 0.0
    %163 = vmatprep.subr.mxu0 0.0
    %164 = vmatpush1.msra.mxu0 0.0
    %165 = vmatprep.subr.mxu0 0.0
    %166 = vmatpush1.msra.mxu0 0.0
    %167 = vmatprep.subr.mxu0 0.0
    %168 = vmatpush1.msra.mxu0 0.0
    %169 = vmatprep.subr.mxu0 0.0
    %170 = vmatpush1.msra.mxu0 0.0
    %171 = vmatprep.subr.mxu0 0.0
    %172 = vmatpush1.msra.mxu0 0.0
    %173 = vmatprep.subr.mxu0 0.0
    %174 = vmatpush1.msra.mxu0 0.0
    %175 = vmatprep.subr.mxu0 0.0
    %176 = vmatpush1.msra.mxu0 0.0
    %177 = vmatprep.subr.mxu0 0.0
    %178 = vmatpush1.msra.mxu0 0.0
    %179 = vmatprep.subr.mxu0 0.0
    %180 = vmatpush1.msra.mxu0 0.0
    %181 = vmatprep.subr.mxu0 0.0
    %182 = vmatpush1.msra.mxu0 0.0
    %183 = vmatprep.subr.mxu0 0.0
    %184 = vmatpush1.msra.mxu0 0.0
    %185 = vmatprep.subr.mxu0 0.0
    %186 = vmatpush1.msra.mxu0 0.0
    %187 = vmatprep.subr.mxu0 0.0
    %188 = vmatpush1.msra.mxu0 0.0
    %189 = vmatprep.subr.mxu0 0.0
    %190 = vmatpush1.msra.mxu0 0.0
    %191 = vmatprep.subr.mxu0 0.0
    %192 = vmatpush1.msra.mxu0 0.0
    %193 = vmatprep.subr.mxu0 0.0
    %194 = vmatpush1.msra.mxu0 0.0
    %195 = vmatprep.subr.mxu0 0.0
    %196 = vmatpush1.msra.mxu0 0.0
    %197 = vmatprep.subr.mxu0 0.0
    %198 = vmatpush1.msra.mxu0 0.0
    %199 = vmatprep.subr.mxu0 0.0
    %200 = vmatpush1.msra.mxu0 0.0
    %201 = vmatprep.subr.mxu0 0.0
    %202 = vmatpush1.msra.mxu0 0.0
    %203 = vmatprep.subr.mxu0 0.0
    %204 = vmatpush1.msra.mxu0 0.0
    %205 = vmatprep.mubr.f32.mxu0 0.0
    %206 = vmatmul.mubr.f32.gmra.mrb[0].mxu0 %v59
    %v207 = vpop.f32.mrb[0].mxu0
    %v208 = vadd.f32 0.0, %v207
    %v209 = vpop.f32.mrb[0].mxu0
    %210 = vdwg.mxu0
    %v211 = vxor.u32 %v208, 2147483648
    %v212 = vmul.f32 %v211, 1.442695
    %v213 = vpow.pop %v212
    %v214 = vadd.f32 %v213, 1.0
    %v215 = vrcp.pop %v214
    %v216 = vmul.f32 1.0, %v215
    %v217 = vmul.f32 %v136, %v49
    %v218 = vld [vmem:[#allocation5] sm:$0xff]
    %v219 = vld [vmem:[#allocation5 + $0x8] sm:$0xff]
    %v220 = vld [vmem:[#allocation5 + $0x10] sm:$0xff]
    %v221 = vld [vmem:[#allocation5 + $0x18] sm:$0xff]
    %v223 = vsel %vm57, %v217, 0
    %225 = vmatprep.subr.mxu0 0.0
    %226 = vmatpush1.msra.mxu0 %v218
    %227 = vmatprep.subr.mxu0 0.0
    %228 = vmatpush1.msra.mxu0 %v219
    %229 = vmatprep.subr.mxu0 0.0
    %230 = vmatpush1.msra.mxu0 %v220
    %231 = vmatprep.subr.mxu0 0.0
    %232 = vmatpush1.msra.mxu0 %v221
    %233 = vmatprep.subr.mxu0 0.0
    %234 = vmatpush1.msra.mxu0 0.0
    %235 = vmatprep.subr.mxu0 0.0
    %236 = vmatpush1.msra.mxu0 0.0
    %237 = vmatprep.subr.mxu0 0.0
    %238 = vmatpush1.msra.mxu0 0.0
    %239 = vmatprep.subr.mxu0 0.0
    %240 = vmatpush1.msra.mxu0 0.0
    %241 = vmatprep.subr.mxu0 0.0
    %242 = vmatpush1.msra.mxu0 0.0
    %243 = vmatprep.subr.mxu0 0.0
    %244 = vmatpush1.msra.mxu0 0.0
    %245 = vmatprep.subr.mxu0 0.0
    %246 = vmatpush1.msra.mxu0 0.0
    %247 = vmatprep.subr.mxu0 0.0
    %248 = vmatpush1.msra.mxu0 0.0
    %249 = vmatprep.subr.mxu0 0.0
    %250 = vmatpush1.msra.mxu0 0.0
    %251 = vmatprep.subr.mxu0 0.0
    %252 = vmatpush1.msra.mxu0 0.0
    %253 = vmatprep.subr.mxu0 0.0
    %254 = vmatpush1.msra.mxu0 0.0
    %255 = vmatprep.subr.mxu0 0.0
    %256 = vmatpush1.msra.mxu0 0.0
    %257 = vmatprep.subr.mxu0 0.0
    %258 = vmatpush1.msra.mxu0 0.0
    %259 = vmatprep.subr.mxu0 0.0
    %260 = vmatpush1.msra.mxu0 0.0
    %261 = vmatprep.subr.mxu0 0.0
    %262 = vmatpush1.msra.mxu0 0.0
    %263 = vmatprep.subr.mxu0 0.0
    %264 = vmatpush1.msra.mxu0 0.0
    %265 = vmatprep.subr.mxu0 0.0
    %266 = vmatpush1.msra.mxu0 0.0
    %267 = vmatprep.subr.mxu0 0.0
    %268 = vmatpush1.msra.mxu0 0.0
    %269 = vmatprep.subr.mxu0 0.0
    %270 = vmatpush1.msra.mxu0 0.0
    %271 = vmatprep.subr.mxu0 0.0
    %272 = vmatpush1.msra.mxu0 0.0
    %273 = vmatprep.subr.mxu0 0.0
    %274 = vmatpush1.msra.mxu0 0.0
    %275 = vmatprep.subr.mxu0 0.0
    %276 = vmatpush1.msra.mxu0 0.0
    %277 = vmatprep.subr.mxu0 0.0
    %278 = vmatpush1.msra.mxu0 0.0
    %279 = vmatprep.subr.mxu0 0.0
    %280 = vmatpush1.msra.mxu0 0.0
    %281 = vmatprep.subr.mxu0 0.0
    %282 = vmatpush1.msra.mxu0 0.0
    %283 = vmatprep.subr.mxu0 0.0
    %284 = vmatpush1.msra.mxu0 0.0
    %285 = vmatprep.subr.mxu0 0.0
    %286 = vmatpush1.msra.mxu0 0.0
    %287 = vmatprep.subr.mxu0 0.0
    %288 = vmatpush1.msra.mxu0 0.0
    %289 = vmatprep.mubr.f32.mxu0 0.0
    %290 = vmatmul.mubr.f32.gmra.mrb[0].mxu0 %v223
    %v291 = vpop.f32.mrb[0].mxu0
    %v292 = vadd.f32 0.0, %v291
    %v293 = vpop.f32.mrb[0].mxu0
    %294 = vdwg.mxu0
    %v295 = vtanh.pop %v292
    %v296 = vsub.f32 1.0, %v216
    %v297 = vsub.f32 %v295, %v49
    %v298 = vmul.f32 %v296, %v297
    %300 = vset.pattern.permute.xlu0 0
    %301 = vperm.xlu0 %300, %v52
    %v302 = vpop.permute.xlu0 %301
    %v304 = vmul.f32 %v298, %v302
    %305 = vst.msk [vmem:[#allocation7] sm:$0xff] %vm57, %v304
    // Predicated region
    $region30: #{node_forward.1} parent=1 // pred_check
      _
    $region31: #{node_forward.1} parent=1 // pred_check_branch
      %307 = sbr.rel (0) target = $region33
    $region32: #{node_forward.1} parent=1 // pred_region
      %s309 = ssub.s32 128, 128
      %310 = vsyncadd [#allocation4], %s309
      %s312 = sshll.u32 [#allocation7], 4
      %s313 = int_to_ptr.vmem [resolvable:$true] %s312
      %315 = dma.vmem_to_hbm [thread:$0]  %s313, 128, %s5, [#allocation4]
    $region33: #{node_forward.1} parent=1 // pred_fallthru
      _
    // Predicated region
    $region34: #{node_forward.1} parent=1 // pred_check
      _
    $region35: #{node_forward.1} parent=1 // pred_check_branch
      %317 = sbr.rel (0) target = $region37
    $region36: #{node_forward.1} parent=1 // pred_region
      %318 = dma.done [#allocation4], 128
    $region37: #{node_forward.1} parent=1 // pred_fallthru
      _
    %319 = vsyncpa [#allocation3], 1
    %320 = vsyncpa [#allocation6], 1
    %321 = vsyncpa [#allocation4], 1

</llo_original>
